<compile_context>
chip_gen: v5e
topology: v5e:2x2
jax: 0.10.0
libtpu: 0.0.40
codegen_flags: <defaults>
</compile_context>

<pallas_src>
import functools

import jax
import jax.numpy as jnp
from jax import lax
from jax.experimental import pallas as pl
from jax.experimental.pallas import tpu as pltpu

EPS = 1e-5


# ------------------------------- kernels -------------------------------

def _linear_stats_kernel(x_ref, w_ref, h_ref, ssum_ref, ssq_ref):
    """h_tile = x_tile @ w ; per-tile batch sum / sum-of-squares of h (MXU reduce)."""
    h = jnp.dot(x_ref[...], w_ref[...], preferred_element_type=jnp.float32)
    h_ref[...] = h
    ones = jnp.ones((1, h.shape[0]), jnp.float32)
    ssum_ref[0] = jnp.dot(ones, h, preferred_element_type=jnp.float32)
    ssq_ref[0] = jnp.dot(ones, h * h, preferred_element_type=jnp.float32)


def _bn_relu_linear_stats_kernel(h_ref, sc_ref, w_ref, y_ref, ssum_ref, ssq_ref,
                                 *, matmul_dtype):
    """y_tile = relu(h_tile * scale + shift) @ w ; per-tile batch stats of y."""
    a = jnp.maximum(h_ref[...] * sc_ref[0:1, :] + sc_ref[1:2, :], 0.0)   # f32 BN1+ReLU
    y = jnp.dot(a.astype(matmul_dtype), w_ref[...],
                preferred_element_type=jnp.float32)
    y_ref[...] = y
    ones = jnp.ones((1, y.shape[0]), jnp.float32)
    ssum_ref[0] = jnp.dot(ones, y, preferred_element_type=jnp.float32)
    ssq_ref[0] = jnp.dot(ones, y * y, preferred_element_type=jnp.float32)


def _bn_apply_kernel(y_ref, sc_ref, o_ref):
    """out_tile = y_tile * scale + shift (BN2, affine already folded)."""
    o_ref[...] = (y_ref[...] * sc_ref[0:1, :] + sc_ref[1:2, :]).astype(o_ref.dtype)


# ------------------------------- wrapper -------------------------------

def _pick_block_rows(batch, target=512):
    """Largest multiple-of-8 divisor of `batch` that is <= target (else full batch)."""
    if batch <= target or batch % 8 != 0:
        return batch
    best = 8
    for cand in range(8, target + 1, 8):
        if batch % cand == 0:
            best = cand
    return best


def _bn_scale_shift(ssum, ssq, n, gamma=None, beta=None):
    """Fold training-mode BatchNorm1d into one per-feature (scale, shift) pair."""
    mean = jnp.sum(ssum, axis=0) / n                    # (1, F)
    ex2 = jnp.sum(ssq, axis=0) / n                      # (1, F)
    var = jnp.maximum(ex2 - mean * mean, 0.0)           # one-pass variance, clamped
    inv = lax.rsqrt(var + EPS)
    if gamma is None:                                   # affine=False
        scale, shift = inv, -mean * inv
    else:
        scale = gamma.reshape(1, -1).astype(jnp.float32) * inv
        shift = beta.reshape(1, -1).astype(jnp.float32) - mean * scale
    return jnp.concatenate([scale, shift], axis=0)      # (2, F) float32


@functools.partial(jax.jit, static_argnames=("block_b", "matmul_dtype"))
def global_embedding(x, w1, b1, g1, be1, w2, b2, block_b=None,
                     matmul_dtype=jnp.bfloat16):
    """Forward of GlobalEmbedding. Linear weights stored transposed ([in, out]).

    b1/b2 are accepted but unused: training-mode BN subtracts the batch mean right
    after each Linear, cancelling constant per-feature biases exactly.
    """
    # TODO(synk): if the module is ever run in eval mode (running stats), the biases
    # must be restored and running mean/var used instead of batch stats.
    del b1, b2
    B, D_in = x.shape
    H = w1.shape[1]
    D_out = w2.shape[1]

    bt = block_b if block_b is not None else _pick_block_rows(B)
    if B % bt != 0 or not (bt == B or bt % 8 == 0):
        raise ValueError(f"block_b={bt} must divide B={B} and be a multiple of 8")
    nb = B // bt

    xm = x.astype(matmul_dtype)
    w1m = w1.astype(matmul_dtype)
    w2m = w2.astype(matmul_dtype)

    params = pltpu.CompilerParams(dimension_semantics=("parallel",))

    # ---- pass 1: Linear1 + per-tile batch stats of h ----
    h, s1, q1 = pl.pallas_call(
        _linear_stats_kernel,
        grid=(nb,),
        in_specs=[pl.BlockSpec((bt, D_in), lambda i: (i, 0)),
                  pl.BlockSpec((D_in, H), lambda i: (0, 0))],
        out_specs=[pl.BlockSpec((bt, H), lambda i: (i, 0)),
                   pl.BlockSpec((1, 1, H), lambda i: (i, 0, 0)),
                   pl.BlockSpec((1, 1, H), lambda i: (i, 0, 0))],
        out_shape=[jax.ShapeDtypeStruct((B, H), jnp.float32),
                   jax.ShapeDtypeStruct((nb, 1, H), jnp.float32),
                   jax.ShapeDtypeStruct((nb, 1, H), jnp.float32)],
        compiler_params=params,
    )(xm, w1m)

    sc1 = _bn_scale_shift(s1, q1, B, g1, be1)            # (2, H) folded BN1 affine

    # ---- pass 2: BN1(folded) + ReLU + Linear2 + per-tile stats of y ----
    y, s2, q2 = pl.pallas_call(
        functools.partial(_bn_relu_linear_stats_kernel, matmul_dtype=matmul_dtype),
        grid=(nb,),
        in_specs=[pl.BlockSpec((bt, H), lambda i: (i, 0)),
                  pl.BlockSpec((2, H), lambda i: (0, 0)),
                  pl.BlockSpec((H, D_out), lambda i: (0, 0))],
        out_specs=[pl.BlockSpec((bt, D_out), lambda i: (i, 0)),
                   pl.BlockSpec((1, 1, D_out), lambda i: (i, 0, 0)),
                   pl.BlockSpec((1, 1, D_out), lambda i: (i, 0, 0))],
        out_shape=[jax.ShapeDtypeStruct((B, D_out), jnp.float32),
                   jax.ShapeDtypeStruct((nb, 1, D_out), jnp.float32),
                   jax.ShapeDtypeStruct((nb, 1, D_out), jnp.float32)],
        compiler_params=params,
    )(h, sc1, w2m)

    sc2 = _bn_scale_shift(s2, q2, B)                     # (2, D_out), affine=False

    # ---- pass 3: BN2 apply ----
    out = pl.pallas_call(
        _bn_apply_kernel,
        grid=(nb,),
        in_specs=[pl.BlockSpec((bt, D_out), lambda i: (i, 0)),
                  pl.BlockSpec((2, D_out), lambda i: (0, 0))],
        out_specs=pl.BlockSpec((bt, D_out), lambda i: (i, 0)),
        out_shape=jax.ShapeDtypeStruct((B, D_out), jnp.float32),
        compiler_params=params,
    )(y, sc2)
    return out


# ------------------------------- reference -------------------------------

def reference(x, w1, b1, g1, be1, w2, b2, matmul_dtype=jnp.float32):
    """Exact PyTorch-module semantics (training-mode BN); optional matmul-input cast."""
    md = matmul_dtype
    h = jnp.dot(x.astype(md), w1.astype(md), preferred_element_type=jnp.float32) + b1
    m = jnp.mean(h, 0, keepdims=True)
    v = jnp.mean((h - m) ** 2, 0, keepdims=True)
    h = (h - m) / jnp.sqrt(v + EPS) * g1 + be1
    h = jnp.maximum(h, 0.0)
    y = jnp.dot(h.astype(md), w2.astype(md), preferred_element_type=jnp.float32) + b2
    m = jnp.mean(y, 0, keepdims=True)
    v = jnp.mean((y - m) ** 2, 0, keepdims=True)
    return (y - m) / jnp.sqrt(v + EPS)


if __name__ == "__main__":
    # Small, lane-dense shapes consistent with the module (real: 768 -> 2048 -> 512).
    B, D_IN, HID, D_OUT = 64, 128, 256, 128

    key = jax.random.PRNGKey(0)
    kx, kw1, kb1, kg1, kbe1, kw2, kb2 = jax.random.split(key, 7)

    x = jax.random.normal(kx, (B, D_IN), dtype=jnp.float32)
    # PyTorch-shaped params; Linear weights stored as [in, out].
    w1 = jax.random.normal(kw1, (D_IN, HID), dtype=jnp.float32) / jnp.sqrt(D_IN)
    b1 = 0.1 * jax.random.normal(kb1, (HID,), dtype=jnp.float32)
    g1 = 1.0 + 0.2 * jax.random.normal(kg1, (HID,), dtype=jnp.float32)
    be1 = 0.1 * jax.random.normal(kbe1, (HID,), dtype=jnp.float32)
    w2 = jax.random.normal(kw2, (HID, D_OUT), dtype=jnp.float32) / jnp.sqrt(HID)
    b2 = 0.1 * jax.random.normal(kb2, (D_OUT,), dtype=jnp.float32)

    # block_b=16 forces a 4-tile grid so the multi-tile stats path is exercised.
    out = global_embedding(x, w1, b1, g1, be1, w2, b2, block_b=16)
    out = jax.block_until_ready(out)
    assert out.shape == (B, D_OUT)

    # Tight check vs. a reference using the same bf16 matmul-input precision.
    ref_bf16 = reference(x, w1, b1, g1, be1, w2, b2, matmul_dtype=jnp.bfloat16)
    err = float(jnp.max(jnp.abs(out - ref_bf16)))
    assert err < 5e-3, f"mismatch vs bf16-matmul reference: {err}"

    # Loose semantic check vs. the full-f32 module reference (difference is bounded
    # by bf16 rounding of the matmul inputs; BN stats themselves are f32).
    ref_f32 = reference(x, w1, b1, g1, be1, w2, b2, matmul_dtype=jnp.float32)
    err32 = float(jnp.max(jnp.abs(out - ref_f32)))
    assert err32 < 1e-1, f"mismatch vs f32 reference: {err32}"

    print("KERNEL_OK")
</pallas_src>

<mosaic_0001>
module attributes {stable_mosaic.version = 11 : i64} {
  func.func @_linear_stats_kernel(%arg0: i32, %arg1: memref<16x128xbf16, #tpu.memory_space<vmem>>, %arg2: memref<128x256xbf16, #tpu.memory_space<vmem>>, %arg3: memref<16x256xf32, #tpu.memory_space<vmem>>, %arg4: memref<1x1x256xf32, #tpu.memory_space<vmem>>, %arg5: memref<1x1x256xf32, #tpu.memory_space<vmem>>) attributes {dimension_semantics = [#tpu.dimension_semantics<parallel>], iteration_bounds = array<i64: 4>, scalar_prefetch = 0 : i64, scratch_operands = 0 : i64, tpu.core_type = #tpu.core_type<tc>, window_params = [{transform_indices = @transform_0, window_bounds = array<i64: 16, 128>}, {pipeline_mode = #tpu.pipeline_mode<synchronous>, transform_indices = @transform_1, window_bounds = array<i64: 128, 256>}, {transform_indices = @transform_2, window_bounds = array<i64: 16, 256>}, {transform_indices = @transform_3, window_bounds = array<i64: 1, 1, 256>}, {transform_indices = @transform_4, window_bounds = array<i64: 1, 1, 256>}]} {
    %c0 = arith.constant 0 : index
    %c0_0 = arith.constant 0 : index
    %0 = vector.load %arg1[%c0, %c0_0] : memref<16x128xbf16, #tpu.memory_space<vmem>>, vector<16x128xbf16>
    %c0_1 = arith.constant 0 : index
    %c0_2 = arith.constant 0 : index
    %1 = vector.load %arg2[%c0_1, %c0_2] : memref<128x256xbf16, #tpu.memory_space<vmem>>, vector<128x256xbf16>
    %cst = arith.constant dense<0.000000e+00> : vector<16x256xf32>
    %2 = tpu.matmul %0, %1, %cst {dimension_numbers = #tpu.dot_dimension_numbers<[1], [0], [0], [1], [0, 0, 1, 1], [], []>} : vector<16x128xbf16>, vector<128x256xbf16>, vector<16x256xf32> -> vector<16x256xf32>
    %c0_3 = arith.constant 0 : index
    %c0_4 = arith.constant 0 : index
    %3 = vector.load %arg3[%c0_3, %c0_4] : memref<16x256xf32, #tpu.memory_space<vmem>>, vector<16x256xf32>
    tpu.vector_store %arg3[%c0_3, %c0_4], %2 {strides = array<i32>} : memref<16x256xf32, #tpu.memory_space<vmem>>, vector<16x256xf32>,
    %cst_5 = arith.constant 1.000000e+00 : f32
    %4 = vector.broadcast %cst_5 : f32 to vector<1x16xf32>
    %cst_6 = arith.constant dense<0.000000e+00> : vector<1x256xf32>
    %5 = tpu.matmul %4, %2, %cst_6 {dimension_numbers = #tpu.dot_dimension_numbers<[1], [0], [0], [1], [0, 0, 1, 1], [], []>} : vector<1x16xf32>, vector<16x256xf32>, vector<1x256xf32> -> vector<1x256xf32>
    %c0_7 = arith.constant 0 : index
    %c0_8 = arith.constant 0 : index
    %c0_9 = arith.constant 0 : index
    %6 = vector.load %arg4[%c0_7, %c0_8, %c0_9] : memref<1x1x256xf32, #tpu.memory_space<vmem>>, vector<1x1x256xf32>
    %7 = vector.shape_cast %6 : vector<1x1x256xf32> to vector<1x256xf32>
    %8 = vector.shape_cast %5 : vector<1x256xf32> to vector<1x1x256xf32>
    tpu.vector_store %arg4[%c0_7, %c0_8, %c0_9], %8 {strides = array<i32>} : memref<1x1x256xf32, #tpu.memory_space<vmem>>, vector<1x1x256xf32>,
    %9 = arith.mulf %2, %2 : vector<16x256xf32>
    %cst_10 = arith.constant dense<0.000000e+00> : vector<1x256xf32>
    %10 = tpu.matmul %4, %9, %cst_10 {dimension_numbers = #tpu.dot_dimension_numbers<[1], [0], [0], [1], [0, 0, 1, 1], [], []>} : vector<1x16xf32>, vector<16x256xf32>, vector<1x256xf32> -> vector<1x256xf32>
    %c0_11 = arith.constant 0 : index
    %c0_12 = arith.constant 0 : index
    %c0_13 = arith.constant 0 : index
    %11 = vector.load %arg5[%c0_11, %c0_12, %c0_13] : memref<1x1x256xf32, #tpu.memory_space<vmem>>, vector<1x1x256xf32>
    %12 = vector.shape_cast %11 : vector<1x1x256xf32> to vector<1x256xf32>
    %13 = vector.shape_cast %10 : vector<1x256xf32> to vector<1x1x256xf32>
    tpu.vector_store %arg5[%c0_11, %c0_12, %c0_13], %13 {strides = array<i32>} : memref<1x1x256xf32, #tpu.memory_space<vmem>>, vector<1x1x256xf32>,
    return
  }
  func.func @transform_0(%arg0: i32) -> (i32, i32) {
    %c0_i32 = arith.constant 0 : i32
    %c0_i32_0 = arith.constant 0 : i32
    return %arg0, %c0_i32 : i32, i32
  }
  func.func @transform_1(%arg0: i32) -> (i32, i32) {
    %c0_i32 = arith.constant 0 : i32
    %c0_i32_0 = arith.constant 0 : i32
    %c0_i32_1 = arith.constant 0 : i32
    return %c0_i32, %c0_i32_0 : i32, i32
  }
  func.func @transform_2(%arg0: i32) -> (i32, i32) {
    %c0_i32 = arith.constant 0 : i32
    %c0_i32_0 = arith.constant 0 : i32
    return %arg0, %c0_i32 : i32, i32
  }
  func.func @transform_3(%arg0: i32) -> (i32, i32, i32) {
    %c0_i32 = arith.constant 0 : i32
    %c0_i32_0 = arith.constant 0 : i32
    %c0_i32_1 = arith.constant 0 : i32
    return %arg0, %c0_i32, %c0_i32_0 : i32, i32, i32
  }
  func.func @transform_4(%arg0: i32) -> (i32, i32, i32) {
    %c0_i32 = arith.constant 0 : i32
    %c0_i32_0 = arith.constant 0 : i32
    %c0_i32_1 = arith.constant 0 : i32
    return %arg0, %c0_i32, %c0_i32_0 : i32, i32, i32
  }
}

module attributes {stable_mosaic.version = 11 : i64} {
  func.func @_bn_relu_linear_stats_kernel(%arg0: i32, %arg1: memref<16x256xf32, #tpu.memory_space<vmem>>, %arg2: memref<2x256xf32, #tpu.memory_space<vmem>>, %arg3: memref<256x128xbf16, #tpu.memory_space<vmem>>, %arg4: memref<16x128xf32, #tpu.memory_space<vmem>>, %arg5: memref<1x1x128xf32, #tpu.memory_space<vmem>>, %arg6: memref<1x1x128xf32, #tpu.memory_space<vmem>>) attributes {dimension_semantics = [#tpu.dimension_semantics<parallel>], iteration_bounds = array<i64: 4>, scalar_prefetch = 0 : i64, scratch_operands = 0 : i64, tpu.core_type = #tpu.core_type<tc>, window_params = [{transform_indices = @transform_0, window_bounds = array<i64: 16, 256>}, {pipeline_mode = #tpu.pipeline_mode<synchronous>, transform_indices = @transform_1, window_bounds = array<i64: 2, 256>}, {pipeline_mode = #tpu.pipeline_mode<synchronous>, transform_indices = @transform_2, window_bounds = array<i64: 256, 128>}, {transform_indices = @transform_3, window_bounds = array<i64: 16, 128>}, {transform_indices = @transform_4, window_bounds = array<i64: 1, 1, 128>}, {transform_indices = @transform_5, window_bounds = array<i64: 1, 1, 128>}]} {
    %c0 = arith.constant 0 : index
    %c0_0 = arith.constant 0 : index
    %0 = vector.load %arg1[%c0, %c0_0] : memref<16x256xf32, #tpu.memory_space<vmem>>, vector<16x256xf32>
    %c0_1 = arith.constant 0 : index
    %c0_2 = arith.constant 0 : index
    %1 = vector.load %arg2[%c0_1, %c0_2] : memref<2x256xf32, #tpu.memory_space<vmem>>, vector<1x256xf32>
    %2 = vector.broadcast %1 : vector<1x256xf32> to vector<16x256xf32>
    %3 = arith.mulf %0, %2 : vector<16x256xf32>
    %c1 = arith.constant 1 : index
    %c0_3 = arith.constant 0 : index
    %4 = vector.load %arg2[%c1, %c0_3] : memref<2x256xf32, #tpu.memory_space<vmem>>, vector<1x256xf32>
    %5 = vector.broadcast %4 : vector<1x256xf32> to vector<16x256xf32>
    %6 = arith.addf %3, %5 : vector<16x256xf32>
    %cst = arith.constant 0.000000e+00 : f32
    %7 = vector.broadcast %cst : f32 to vector<16x256xf32>
    %8 = arith.maximumf %6, %7 : vector<16x256xf32>
    %9 = arith.truncf %8 : vector<16x256xf32> to vector<16x256xbf16>
    %c0_4 = arith.constant 0 : index
    %c0_5 = arith.constant 0 : index
    %10 = vector.load %arg3[%c0_4, %c0_5] : memref<256x128xbf16, #tpu.memory_space<vmem>>, vector<256x128xbf16>
    %cst_6 = arith.constant dense<0.000000e+00> : vector<16x128xf32>
    %11 = tpu.matmul %9, %10, %cst_6 {dimension_numbers = #tpu.dot_dimension_numbers<[1], [0], [0], [1], [0, 0, 1, 1], [], []>} : vector<16x256xbf16>, vector<256x128xbf16>, vector<16x128xf32> -> vector<16x128xf32>
    %c0_7 = arith.constant 0 : index
    %c0_8 = arith.constant 0 : index
    %12 = vector.load %arg4[%c0_7, %c0_8] : memref<16x128xf32, #tpu.memory_space<vmem>>, vector<16x128xf32>
    tpu.vector_store %arg4[%c0_7, %c0_8], %11 {strides = array<i32>} : memref<16x128xf32, #tpu.memory_space<vmem>>, vector<16x128xf32>,
    %cst_9 = arith.constant 1.000000e+00 : f32
    %13 = vector.broadcast %cst_9 : f32 to vector<1x16xf32>
    %cst_10 = arith.constant dense<0.000000e+00> : vector<1x128xf32>
    %14 = tpu.matmul %13, %11, %cst_10 {dimension_numbers = #tpu.dot_dimension_numbers<[1], [0], [0], [1], [0, 0, 1, 1], [], []>} : vector<1x16xf32>, vector<16x128xf32>, vector<1x128xf32> -> vector<1x128xf32>
    %c0_11 = arith.constant 0 : index
    %c0_12 = arith.constant 0 : index
    %c0_13 = arith.constant 0 : index
    %15 = vector.load %arg5[%c0_11, %c0_12, %c0_13] : memref<1x1x128xf32, #tpu.memory_space<vmem>>, vector<1x1x128xf32>
    %16 = vector.shape_cast %15 : vector<1x1x128xf32> to vector<1x128xf32>
    %17 = vector.shape_cast %14 : vector<1x128xf32> to vector<1x1x128xf32>
    tpu.vector_store %arg5[%c0_11, %c0_12, %c0_13], %17 {strides = array<i32>} : memref<1x1x128xf32, #tpu.memory_space<vmem>>, vector<1x1x128xf32>,
    %18 = arith.mulf %11, %11 : vector<16x128xf32>
    %cst_14 = arith.constant dense<0.000000e+00> : vector<1x128xf32>
    %19 = tpu.matmul %13, %18, %cst_14 {dimension_numbers = #tpu.dot_dimension_numbers<[1], [0], [0], [1], [0, 0, 1, 1], [], []>} : vector<1x16xf32>, vector<16x128xf32>, vector<1x128xf32> -> vector<1x128xf32>
    %c0_15 = arith.constant 0 : index
    %c0_16 = arith.constant 0 : index
    %c0_17 = arith.constant 0 : index
    %20 = vector.load %arg6[%c0_15, %c0_16, %c0_17] : memref<1x1x128xf32, #tpu.memory_space<vmem>>, vector<1x1x128xf32>
    %21 = vector.shape_cast %20 : vector<1x1x128xf32> to vector<1x128xf32>
    %22 = vector.shape_cast %19 : vector<1x128xf32> to vector<1x1x128xf32>
    tpu.vector_store %arg6[%c0_15, %c0_16, %c0_17], %22 {strides = array<i32>} : memref<1x1x128xf32, #tpu.memory_space<vmem>>, vector<1x1x128xf32>,
    return
  }
  func.func @transform_0(%arg0: i32) -> (i32, i32) {
    %c0_i32 = arith.constant 0 : i32
    %c0_i32_0 = arith.constant 0 : i32
    return %arg0, %c0_i32 : i32, i32
  }
  func.func @transform_1(%arg0: i32) -> (i32, i32) {
    %c0_i32 = arith.constant 0 : i32
    %c0_i32_0 = arith.constant 0 : i32
    %c0_i32_1 = arith.constant 0 : i32
    return %c0_i32, %c0_i32_0 : i32, i32
  }
  func.func @transform_2(%arg0: i32) -> (i32, i32) {
    %c0_i32 = arith.constant 0 : i32
    %c0_i32_0 = arith.constant 0 : i32
    %c0_i32_1 = arith.constant 0 : i32
    return %c0_i32, %c0_i32_0 : i32, i32
  }
  func.func @transform_3(%arg0: i32) -> (i32, i32) {
    %c0_i32 = arith.constant 0 : i32
    %c0_i32_0 = arith.constant 0 : i32
    return %arg0, %c0_i32 : i32, i32
  }
  func.func @transform_4(%arg0: i32) -> (i32, i32, i32) {
    %c0_i32 = arith.constant 0 : i32
    %c0_i32_0 = arith.constant 0 : i32
    %c0_i32_1 = arith.constant 0 : i32
    return %arg0, %c0_i32, %c0_i32_0 : i32, i32, i32
  }
  func.func @transform_5(%arg0: i32) -> (i32, i32, i32) {
    %c0_i32 = arith.constant 0 : i32
    %c0_i32_0 = arith.constant 0 : i32
    %c0_i32_1 = arith.constant 0 : i32
    return %arg0, %c0_i32, %c0_i32_0 : i32, i32, i32
  }
}

module attributes {stable_mosaic.version = 11 : i64} {
  func.func @_bn_apply_kernel(%arg0: i32, %arg1: memref<16x128xf32, #tpu.memory_space<vmem>>, %arg2: memref<2x128xf32, #tpu.memory_space<vmem>>, %arg3: memref<16x128xf32, #tpu.memory_space<vmem>>) attributes {dimension_semantics = [#tpu.dimension_semantics<parallel>], iteration_bounds = array<i64: 4>, scalar_prefetch = 0 : i64, scratch_operands = 0 : i64, tpu.core_type = #tpu.core_type<tc>, window_params = [{transform_indices = @transform_0, window_bounds = array<i64: 16, 128>}, {pipeline_mode = #tpu.pipeline_mode<synchronous>, transform_indices = @transform_1, window_bounds = array<i64: 2, 128>}, {transform_indices = @transform_2, window_bounds = array<i64: 16, 128>}]} {
    %c0 = arith.constant 0 : index
    %c0_0 = arith.constant 0 : index
    %0 = vector.load %arg1[%c0, %c0_0] : memref<16x128xf32, #tpu.memory_space<vmem>>, vector<16x128xf32>
    %c0_1 = arith.constant 0 : index
    %c0_2 = arith.constant 0 : index
    %1 = vector.load %arg2[%c0_1, %c0_2] : memref<2x128xf32, #tpu.memory_space<vmem>>, vector<1x128xf32>
    %2 = vector.broadcast %1 : vector<1x128xf32> to vector<16x128xf32>
    %3 = arith.mulf %0, %2 : vector<16x128xf32>
    %c1 = arith.constant 1 : index
    %c0_3 = arith.constant 0 : index
    %4 = vector.load %arg2[%c1, %c0_3] : memref<2x128xf32, #tpu.memory_space<vmem>>, vector<1x128xf32>
    %5 = vector.broadcast %4 : vector<1x128xf32> to vector<16x128xf32>
    %6 = arith.addf %3, %5 : vector<16x128xf32>
    %c0_4 = arith.constant 0 : index
    %c0_5 = arith.constant 0 : index
    %7 = vector.load %arg3[%c0_4, %c0_5] : memref<16x128xf32, #tpu.memory_space<vmem>>, vector<16x128xf32>
    tpu.vector_store %arg3[%c0_4, %c0_5], %6 {strides = array<i32>} : memref<16x128xf32, #tpu.memory_space<vmem>>, vector<16x128xf32>,
    return
  }
  func.func @transform_0(%arg0: i32) -> (i32, i32) {
    %c0_i32 = arith.constant 0 : i32
    %c0_i32_0 = arith.constant 0 : i32
    return %arg0, %c0_i32 : i32, i32
  }
  func.func @transform_1(%arg0: i32) -> (i32, i32) {
    %c0_i32 = arith.constant 0 : i32
    %c0_i32_0 = arith.constant 0 : i32
    %c0_i32_1 = arith.constant 0 : i32
    return %c0_i32, %c0_i32_0 : i32, i32
  }
  func.func @transform_2(%arg0: i32) -> (i32, i32) {
    %c0_i32 = arith.constant 0 : i32
    %c0_i32_0 = arith.constant 0 : i32
    return %arg0, %c0_i32 : i32, i32
  }
}

</mosaic_0001>

<llo_original>
// kernel: global_embedding.3
$region0: #{global_embedding.3}
  #allocation0 [shape = 'u32[]', space=smem, size = 0x4, offset = 0x4, fixed_abs, tag = 'smem constant byte address 0x4 - core index']
  #allocation1 [shape = 'u32[72,128]{1,0:T(1,128)}', space=vmem, size = 0x9000, scoped, tag = 'internal scratch']
  %s0 = inlined_call_operand.vmem [shape: bf16[64,128], index: 0, kind: input, shape index: {}]
  %s1 = inlined_call_operand.vmem [shape: bf16[128,256], index: 1, kind: input, shape index: {}]
  %s2 = inlined_call_operand.vmem [shape: f32[64,256], index: 2, kind: output, shape index: {0}]
  %s3 = inlined_call_operand.vmem [shape: f32[4,1,256], index: 3, kind: output, shape index: {1}]
  %s4 = inlined_call_operand.vmem [shape: f32[4,1,256], index: 4, kind: output, shape index: {2}]
  %5 = xla_tuple %s2, %s3, %s4
  %s6 = sld [smem:[#allocation0]]
  $region57: #{global_embedding.3} parent=0
    _
  %s8 = ssub.s32 1, %s6
  %s9 = scalar_select 0, %s8, %s6
  loop: start=0, step=1, limit=6
  $region2: #{global_embedding.3} parent=0 // loop_pre_header
    _
  $region3: #{global_embedding.3} parent=0 // loop_header
    %s11 = sphi 0, %s15
    %p12 = scmp.ge.s32.totalorder %s11, 6
    %s21 = sphi 0, %s23
    %s24 = sphi 0, %s21
    %s25 = sphi 0, %s24
    %s41 = sphi 0, %s25
    %s45 = sphi 0, %s45
    %s47 = sphi 0, %s45
    %s48 = sphi 0, %s47
    %s62 = sphi 0, %s48
    %s68 = sphi 0, %s70
    %s71 = sphi 0, %s68
    %s72 = sphi 0, %s71
    %s88 = sphi 0, %s72
    %s94 = sphi 0, %s96
    %s97 = sphi 0, %s94
    %s98 = sphi 0, %s97
    %s114 = sphi 0, %s98
    %s120 = sphi 0, %s122
    %s123 = sphi 0, %s120
    %s124 = sphi 0, %s123
    %s140 = sphi 0, %s124
  $region4: #{global_embedding.3} parent=0 // loop_header_branch
    %14 = sbr.rel (%p12) target = $region8
  $region5: #{global_embedding.3} parent=0 // loop_body
    %s16 = ssub.s32 %s11, 1
    %s17 = ssub.s32 %s11, 2
    %s18 = sadd.s32 %s11, 1
    %s19 = ssub.s32 %s11, %s18
    %p20 = scmp.eq.s32.totalorder %s19, 0
    %s22 = sadd.s32 %s21, 1
    %s23 = scalar_select %p20, %s21, %s22
    %p26 = pneg %p20
    %p27 = scmp.eq.s32.totalorder %s11, 3
    %p28 = por %p26, %p27
    %p29 = scmp.ne.s32.totalorder %s21, %s24
    %p30 = scmp.eq.s32.totalorder %s11, 0
    %p31 = por %p29, %p30
    %p32 = scmp.ne.s32.totalorder %s21, %s24
    %p33 = scmp.eq.s32.totalorder %s16, 3
    %p34 = por %p32, %p33
    %p35 = scmp.ne.s32.totalorder %s24, %s25
    %p36 = scmp.eq.s32.totalorder %s16, 0
    %p37 = por %p35, %p36
    %p38 = scmp.ne.s32.totalorder %s24, %s25
    %p39 = scmp.eq.s32.totalorder %s17, 3
    %p40 = por %p38, %p39
    %p42 = scmp.ne.s32.totalorder %s25, %s41
    %p43 = scmp.eq.s32.totalorder %s17, 0
    %p44 = por %p42, %p43
    %s46 = sadd.s32 %s45, 1
    %p49 = scmp.eq.s32.totalorder %s11, 3
    %p50 = scmp.ne.s32.totalorder %s45, %s47
    %p51 = scmp.eq.s32.totalorder %s11, 0
    %p52 = por %p50, %p51
    %p53 = scmp.ne.s32.totalorder %s45, %s47
    %p54 = scmp.eq.s32.totalorder %s16, 3
    %p55 = por %p53, %p54
    %p56 = scmp.ne.s32.totalorder %s47, %s48
    %p57 = scmp.eq.s32.totalorder %s16, 0
    %p58 = por %p56, %p57
    %p59 = scmp.ne.s32.totalorder %s47, %s48
    %p60 = scmp.eq.s32.totalorder %s17, 3
    %p61 = por %p59, %p60
    %p63 = scmp.ne.s32.totalorder %s48, %s62
    %p64 = scmp.eq.s32.totalorder %s17, 0
    %p65 = por %p63, %p64
    %s66 = ssub.s32 %s11, %s18
    %p67 = scmp.eq.s32.totalorder %s66, 0
    %s69 = sadd.s32 %s68, 1
    %s70 = scalar_select %p67, %s68, %s69
    %p73 = pneg %p67
    %p74 = scmp.eq.s32.totalorder %s11, 3
    %p75 = por %p73, %p74
    %p76 = scmp.ne.s32.totalorder %s68, %s71
    %p77 = scmp.eq.s32.totalorder %s11, 0
    %p78 = por %p76, %p77
    %p79 = scmp.ne.s32.totalorder %s68, %s71
    %p80 = scmp.eq.s32.totalorder %s16, 3
    %p81 = por %p79, %p80
    %p82 = scmp.ne.s32.totalorder %s71, %s72
    %p83 = scmp.eq.s32.totalorder %s16, 0
    %p84 = por %p82, %p83
    %p85 = scmp.ne.s32.totalorder %s71, %s72
    %p86 = scmp.eq.s32.totalorder %s17, 3
    %p87 = por %p85, %p86
    %p89 = scmp.ne.s32.totalorder %s72, %s88
    %p90 = scmp.eq.s32.totalorder %s17, 0
    %p91 = por %p89, %p90
    %s92 = ssub.s32 %s11, %s18
    %p93 = scmp.eq.s32.totalorder %s92, 0
    %s95 = sadd.s32 %s94, 1
    %s96 = scalar_select %p93, %s94, %s95
    %p99 = pneg %p93
    %p100 = scmp.eq.s32.totalorder %s11, 3
    %p101 = por %p99, %p100
    %p102 = scmp.ne.s32.totalorder %s94, %s97
    %p103 = scmp.eq.s32.totalorder %s11, 0
    %p104 = por %p102, %p103
    %p105 = scmp.ne.s32.totalorder %s94, %s97
    %p106 = scmp.eq.s32.totalorder %s16, 3
    %p107 = por %p105, %p106
    %p108 = scmp.ne.s32.totalorder %s97, %s98
    %p109 = scmp.eq.s32.totalorder %s16, 0
    %p110 = por %p108, %p109
    %p111 = scmp.ne.s32.totalorder %s97, %s98
    %p112 = scmp.eq.s32.totalorder %s17, 3
    %p113 = por %p111, %p112
    %p115 = scmp.ne.s32.totalorder %s98, %s114
    %p116 = scmp.eq.s32.totalorder %s17, 0
    %p117 = por %p115, %p116
    %s118 = ssub.s32 %s11, %s18
    %p119 = scmp.eq.s32.totalorder %s118, 0
    %s121 = sadd.s32 %s120, 1
    %s122 = scalar_select %p119, %s120, %s121
    %p125 = pneg %p119
    %p126 = scmp.eq.s32.totalorder %s11, 3
    %p127 = por %p125, %p126
    %p128 = scmp.ne.s32.totalorder %s120, %s123
    %p129 = scmp.eq.s32.totalorder %s11, 0
    %p130 = por %p128, %p129
    %p131 = scmp.ne.s32.totalorder %s120, %s123
    %p132 = scmp.eq.s32.totalorder %s16, 3
    %p133 = por %p131, %p132
    %p134 = scmp.ne.s32.totalorder %s123, %s124
    %p135 = scmp.eq.s32.totalorder %s16, 0
    %p136 = por %p134, %p135
    %p137 = scmp.ne.s32.totalorder %s123, %s124
    %p138 = scmp.eq.s32.totalorder %s17, 3
    %p139 = por %p137, %p138
    %p141 = scmp.ne.s32.totalorder %s124, %s140
    %p142 = scmp.eq.s32.totalorder %s17, 0
    %p143 = por %p141, %p142
    %p144 = scmp.le.s32.totalorder 1, %s11
    %p145 = scmp.lt.s32.totalorder %s11, 5
    %p146 = pnand %p144, %p145
    %p147 = pneg %p146
    // Predicated region
    $region9: #{global_embedding.3} parent=5 // pred_check
      _
    $region10: #{global_embedding.3} parent=5 // pred_check_branch
      %149 = sbr.rel (%p146) target = $region12
    $region11: #{global_embedding.3} parent=5 // pred_region
      %s150 = ssub.s32 %s11, 1
      // Predicated region
      $region13: #{global_embedding.3} parent=11 // pred_check
        %p151 = pneg %p58
      $region14: #{global_embedding.3} parent=11 // pred_check_branch
        %153 = sbr.rel (%p151) target = $region16
      $region15: #{global_embedding.3} parent=11 // pred_region
        _
      $region16: #{global_embedding.3} parent=11 // pred_fallthru
        _
    $region12: #{global_embedding.3} parent=5 // pred_fallthru
      _
    %p154 = scmp.lt.s32.totalorder %s11, 4
    // Predicated region
    $region17: #{global_embedding.3} parent=5 // pred_check
      %p155 = pneg %p154
    $region18: #{global_embedding.3} parent=5 // pred_check_branch
      %157 = sbr.rel (%p155) target = $region20
    $region19: #{global_embedding.3} parent=5 // pred_region
      // Predicated region
      $region21: #{global_embedding.3} parent=19 // pred_check
        %p158 = pneg %p31
      $region22: #{global_embedding.3} parent=19 // pred_check_branch
        %160 = sbr.rel (%p158) target = $region24
      $region23: #{global_embedding.3} parent=19 // pred_region
        %s161 = smul.u32 2, %s11
        %p162 = scmp.lt.s32.totalorder %s161, 7
        %s163 = scalar_select %p162, %s161, 7
        %s164 = smul.addr %s163, 4
        %s165 = scalar_lea.vmem %s0, %s164
        %s166 = smul.u32 2, %s11
      $region24: #{global_embedding.3} parent=19 // pred_fallthru
        _
    $region20: #{global_embedding.3} parent=5 // pred_fallthru
      _
    %p167 = scmp.le.s32.totalorder 1, %s11
    %p168 = scmp.lt.s32.totalorder %s11, 5
    %p169 = pnand %p167, %p168
    %p170 = pneg %p169
    // Predicated region
    $region25: #{global_embedding.3} parent=5 // pred_check
      _
    $region26: #{global_embedding.3} parent=5 // pred_check_branch
      %172 = sbr.rel (%p169) target = $region28
    $region27: #{global_embedding.3} parent=5 // pred_region
      %s173 = ssub.s32 %s11, 1
      %s174 = smul.u32 2, %s16
      %p175 = scmp.lt.s32.totalorder %s174, 7
      %s176 = scalar_select %p175, %s174, 7
      %s177 = smul.addr %s176, 4
      %s178 = scalar_lea.vmem %s0, %s177
      %p179 = pneg %p37
      %p180 = pneg %p34
      %p181 = pneg %p58
      %p182 = pneg %p55
      %p183 = pneg %p84
      %p184 = pneg %p81
      %s185 = smul.u32 2, %s16
      %p186 = scmp.lt.s32.totalorder %s185, 7
      %s187 = scalar_select %p186, %s185, 7
      %s188 = smul.addr %s187, 2
      %s189 = smul.addr %s188, 8
      %s190 = scalar_lea.vmem %s2, %s189
      %p191 = pneg %p110
      %p192 = pneg %p107
      %p193 = scmp.lt.s32.totalorder %s16, 3
      %s194 = scalar_select %p193, %s16, 3
      %s195 = smul.addr %s194, 2
      %s196 = scalar_lea.vmem %s3, %s195
      %p197 = pneg %p136
      %p198 = pneg %p133
      %p199 = scmp.lt.s32.totalorder %s16, 3
      %s200 = scalar_select %p199, %s16, 3
      %s201 = smul.addr %s200, 2
      %s202 = scalar_lea.vmem %s4, %s201
      %s203 = smul.u32 2, %s16
      %p204 = scmp.lt.s32.totalorder %s203, 7
      %s205 = scalar_select %p204, %s203, 7
      %s206 = smul.addr %s205, 4
      %s207 = scalar_lea.vmem %s0, %s206
      %s208 = smul.u32 2, %s16
      %s209 = smul.u32 2, %s16
      %p210 = scmp.lt.s32.totalorder %s209, 7
      %s211 = scalar_select %p210, %s209, 7
      %s212 = smul.addr %s211, 2
      %s213 = smul.addr %s212, 8
      %s214 = scalar_lea.vmem %s2, %s213
      %s215 = smul.u32 2, %s16
      %p216 = scmp.lt.s32.totalorder %s16, 3
      %s217 = scalar_select %p216, %s16, 3
      %s218 = smul.addr %s217, 2
      %s219 = scalar_lea.vmem %s3, %s218
      %p220 = scmp.lt.s32.totalorder %s16, 3
      %s221 = scalar_select %p220, %s16, 3
      %s222 = smul.addr %s221, 2
      %s223 = scalar_lea.vmem %s4, %s222
      %v224 = vld [vmem:[%s207] sm:$0xf]
      %v225 = vld [vmem:[%s207 + $0x4] sm:$0xf]
      %v226 = vld [vmem:[%s1] sm:$0xff]
      %v227 = vld [vmem:[%s1 + $0x8] sm:$0xff]
      %v228 = vld [vmem:[%s1 + $0x10] sm:$0xff]
      %v229 = vld [vmem:[%s1 + $0x18] sm:$0xff]
      %v230 = vld [vmem:[%s1 + $0x20] sm:$0xff]
      %v231 = vld [vmem:[%s1 + $0x28] sm:$0xff]
      %v232 = vld [vmem:[%s1 + $0x30] sm:$0xff]
      %v233 = vld [vmem:[%s1 + $0x38] sm:$0xff]
      %v234 = vld [vmem:[%s1 + $0x40] sm:$0xff]
      %v235 = vld [vmem:[%s1 + $0x48] sm:$0xff]
      %v236 = vld [vmem:[%s1 + $0x50] sm:$0xff]
      %v237 = vld [vmem:[%s1 + $0x58] sm:$0xff]
      %v238 = vld [vmem:[%s1 + $0x60] sm:$0xff]
      %v239 = vld [vmem:[%s1 + $0x68] sm:$0xff]
      %v240 = vld [vmem:[%s1 + $0x70] sm:$0xff]
      %v241 = vld [vmem:[%s1 + $0x78] sm:$0xff]
      %v244 = vunpack.c.l.b16 %v224
      %v245 = vunpack.c.l.b16 %v225
      %v246 = vpack.c.b16 %v245, %v244
      %v264 = vunpack.c.l.b16 %v226
      %v265 = vunpack.c.h.b16 %v226
      %v266 = vunpack.c.l.b16 %v227
      %v267 = vunpack.c.h.b16 %v227
      %v268 = vunpack.c.l.b16 %v228
      %v269 = vunpack.c.h.b16 %v228
      %v270 = vunpack.c.l.b16 %v229
      %v271 = vunpack.c.h.b16 %v229
      %v272 = vunpack.c.l.b16 %v230
      %v273 = vunpack.c.h.b16 %v230
      %v274 = vunpack.c.l.b16 %v231
      %v275 = vunpack.c.h.b16 %v231
      %v276 = vunpack.c.l.b16 %v232
      %v277 = vunpack.c.h.b16 %v232
      %v278 = vunpack.c.l.b16 %v233
      %v279 = vunpack.c.h.b16 %v233
      %v280 = vunpack.c.l.b16 %v234
      %v281 = vunpack.c.h.b16 %v234
      %v282 = vunpack.c.l.b16 %v235
      %v283 = vunpack.c.h.b16 %v235
      %v284 = vunpack.c.l.b16 %v236
      %v285 = vunpack.c.h.b16 %v236
      %v286 = vunpack.c.l.b16 %v237
      %v287 = vunpack.c.h.b16 %v237
      %v288 = vunpack.c.l.b16 %v238
      %v289 = vunpack.c.h.b16 %v238
      %v290 = vunpack.c.l.b16 %v239
      %v291 = vunpack.c.h.b16 %v239
      %v292 = vunpack.c.l.b16 %v240
      %v293 = vunpack.c.h.b16 %v240
      %v294 = vunpack.c.l.b16 %v241
      %v295 = vunpack.c.h.b16 %v241
      %v296 = vpack.c.b16 %v266, %v264
      %v297 = vpack.c.b16 %v267, %v265
      %v298 = vpack.c.b16 %v270, %v268
      %v299 = vpack.c.b16 %v271, %v269
      %v300 = vpack.c.b16 %v274, %v272
      %v301 = vpack.c.b16 %v275, %v273
      %v302 = vpack.c.b16 %v278, %v276
      %v303 = vpack.c.b16 %v279, %v277
      %v304 = vpack.c.b16 %v282, %v280
      %v305 = vpack.c.b16 %v283, %v281
      %v306 = vpack.c.b16 %v286, %v284
      %v307 = vpack.c.b16 %v287, %v285
      %v308 = vpack.c.b16 %v290, %v288
      %v309 = vpack.c.b16 %v291, %v289
      %v310 = vpack.c.b16 %v294, %v292
      %v311 = vpack.c.b16 %v295, %v293
      %328 = vmatpush.bf16.msra.mxu0 %v310
      %329 = vmatpush.bf16.msra.mxu0 %v308
      %330 = vmatpush.bf16.msra.mxu0 %v306
      %331 = vmatpush.bf16.msra.mxu0 %v304
      %332 = vmatpush.bf16.msra.mxu0 %v302
      %333 = vmatpush.bf16.msra.mxu0 %v300
      %334 = vmatpush.bf16.msra.mxu0 %v298
      %335 = vmatpush.bf16.msra.mxu0 %v296
      %336 = vmatmul.bf16.gmra.mxu0 %v246
      %v337 = vpop.f32.mrf.mxu0
      %v338 = vadd.f32 0.0, %v337
      %v339 = vpop.f32.mrf.mxu0
      %v340 = vadd.f32 0.0, %v339
      %341 = vdwg.mxu0
      %342 = vmatpush.bf16.msra.mxu0 %v311
      %343 = vmatpush.bf16.msra.mxu0 %v309
      %344 = vmatpush.bf16.msra.mxu0 %v307
      %345 = vmatpush.bf16.msra.mxu0 %v305
      %346 = vmatpush.bf16.msra.mxu0 %v303
      %347 = vmatpush.bf16.msra.mxu0 %v301
      %348 = vmatpush.bf16.msra.mxu0 %v299
      %349 = vmatpush.bf16.msra.mxu0 %v297
      %350 = vmatmul.bf16.gmra.mxu0 %v246
      %v351 = vpop.f32.mrf.mxu0
      %v352 = vadd.f32 0.0, %v351
      %v353 = vpop.f32.mrf.mxu0
      %v354 = vadd.f32 0.0, %v353
      %355 = vdwg.mxu0
      %356 = vst [vmem:[%s214] sm:$0xff] %v338
      %357 = vst [vmem:[%s214 + $0x8] sm:$0xff] %v352
      %358 = vst [vmem:[%s214 + $0x10] sm:$0xff] %v340
      %359 = vst [vmem:[%s214 + $0x18] sm:$0xff] %v354
      %vm360 = vcmask 130048
      %v362 = vsel %vm360, 1.0, 0
      %364 = vmatpush.msra.mxu0 0.0
      %365 = vmatpush.msra.mxu0 0.0
      %366 = vmatpush.msra.mxu0 0.0
      %367 = vmatpush.msra.mxu0 0.0
      %368 = vmatpush.msra.mxu0 0.0
      %369 = vmatpush.msra.mxu0 0.0
      %370 = vmatpush.msra.mxu0 0.0
      %371 = vmatpush.msra.mxu0 0.0
      %372 = vmatpush.msra.mxu0 0.0
      %373 = vmatpush.msra.mxu0 0.0
      %374 = vmatpush.msra.mxu0 0.0
      %375 = vmatpush.msra.mxu0 0.0
      %376 = vmatpush.msra.mxu0 0.0
      %377 = vmatpush.msra.mxu0 0.0
      %378 = vmatpush.msra.mxu0 %v340
      %379 = vmatpush.msra.mxu0 %v338
      %380 = vmatmul.f32.gmra.mxu0 %v362
      %v381 = vpop.f32.mrf.mxu0
      %v382 = vadd.f32 0.0, %v381
      %383 = vdwg.mxu0
      %384 = vmatpush.msra.mxu0 0.0
      %385 = vmatpush.msra.mxu0 0.0
      %386 = vmatpush.msra.mxu0 0.0
      %387 = vmatpush.msra.mxu0 0.0
      %388 = vmatpush.msra.mxu0 0.0
      %389 = vmatpush.msra.mxu0 0.0
      %390 = vmatpush.msra.mxu0 0.0
      %391 = vmatpush.msra.mxu0 0.0
      %392 = vmatpush.msra.mxu0 0.0
      %393 = vmatpush.msra.mxu0 0.0
      %394 = vmatpush.msra.mxu0 0.0
      %395 = vmatpush.msra.mxu0 0.0
      %396 = vmatpush.msra.mxu0 0.0
      %397 = vmatpush.msra.mxu0 0.0
      %398 = vmatpush.msra.mxu0 %v354
      %399 = vmatpush.msra.mxu0 %v352
      %400 = vmatmul.f32.gmra.mxu0 %v362
      %v401 = vpop.f32.mrf.mxu0
      %v402 = vadd.f32 0.0, %v401
      %403 = vdwg.mxu0
      %v406 = vrot.slane %v402, 7
      %vm407 = vcmask 1040384
      %v408 = vsel %vm407, %v382, %v406
      %v410 = vlaneseq
      %vm411 = vcmp.ge.s32.totalorder %v410, 0
      %vm412 = vcmp.lt.s32.totalorder %v410, 256
      %vm413 = vmand %vm411, %vm412
      %414 = vst.msk [vmem:[%s219] sm:$0x3] %vm413, %v408
      %v415 = vmul.f32 %v338, %v338
      %v416 = vmul.f32 %v352, %v352
      %v417 = vmul.f32 %v340, %v340
      %v418 = vmul.f32 %v354, %v354
      %419 = vmatpush.msra.mxu0 0.0
      %420 = vmatpush.msra.mxu0 0.0
      %421 = vmatpush.msra.mxu0 0.0
      %422 = vmatpush.msra.mxu0 0.0
      %423 = vmatpush.msra.mxu0 0.0
      %424 = vmatpush.msra.mxu0 0.0
      %425 = vmatpush.msra.mxu0 0.0
      %426 = vmatpush.msra.mxu0 0.0
      %427 = vmatpush.msra.mxu0 0.0
      %428 = vmatpush.msra.mxu0 0.0
      %429 = vmatpush.msra.mxu0 0.0
      %430 = vmatpush.msra.mxu0 0.0
      %431 = vmatpush.msra.mxu0 0.0
      %432 = vmatpush.msra.mxu0 0.0
      %433 = vmatpush.msra.mxu0 %v417
      %434 = vmatpush.msra.mxu0 %v415
      %435 = vmatmul.f32.gmra.mxu0 %v362
      %v436 = vpop.f32.mrf.mxu0
      %v437 = vadd.f32 0.0, %v436
      %438 = vdwg.mxu0
      %439 = vmatpush.msra.mxu0 0.0
      %440 = vmatpush.msra.mxu0 0.0
      %441 = vmatpush.msra.mxu0 0.0
      %442 = vmatpush.msra.mxu0 0.0
      %443 = vmatpush.msra.mxu0 0.0
      %444 = vmatpush.msra.mxu0 0.0
      %445 = vmatpush.msra.mxu0 0.0
      %446 = vmatpush.msra.mxu0 0.0
      %447 = vmatpush.msra.mxu0 0.0
      %448 = vmatpush.msra.mxu0 0.0
      %449 = vmatpush.msra.mxu0 0.0
      %450 = vmatpush.msra.mxu0 0.0
      %451 = vmatpush.msra.mxu0 0.0
      %452 = vmatpush.msra.mxu0 0.0
      %453 = vmatpush.msra.mxu0 %v418
      %454 = vmatpush.msra.mxu0 %v416
      %455 = vmatmul.f32.gmra.mxu0 %v362
      %v456 = vpop.f32.mrf.mxu0
      %v457 = vadd.f32 0.0, %v456
      %458 = vdwg.mxu0
      %v461 = vrot.slane %v457, 7
      %v462 = vsel %vm407, %v437, %v461
      %464 = vst.msk [vmem:[%s223] sm:$0x3] %vm413, %v462
      %s465 = smul.u32 2, %s16
      %p466 = scmp.lt.s32.totalorder %s465, 7
      %s467 = scalar_select %p466, %s465, 7
      %s468 = smul.addr %s467, 2
      %s469 = smul.addr %s468, 8
      %s470 = scalar_lea.vmem %s2, %s469
      %p471 = scmp.lt.s32.totalorder %s16, 3
      %s472 = scalar_select %p471, %s16, 3
      %s473 = smul.addr %s472, 2
      %s474 = scalar_lea.vmem %s3, %s473
      %p475 = scmp.lt.s32.totalorder %s16, 3
      %s476 = scalar_select %p475, %s16, 3
      %s477 = smul.addr %s476, 2
      %s478 = scalar_lea.vmem %s4, %s477
      // Predicated region
      $region29: #{global_embedding.3} parent=27 // pred_check
        %p479 = pneg %p81
      $region30: #{global_embedding.3} parent=27 // pred_check_branch
        %481 = sbr.rel (%p479) target = $region32
      $region31: #{global_embedding.3} parent=27 // pred_region
        %s482 = smul.u32 2, %s16
      $region32: #{global_embedding.3} parent=27 // pred_fallthru
        _
      // Predicated region
      $region33: #{global_embedding.3} parent=27 // pred_check
        %p483 = pneg %p107
      $region34: #{global_embedding.3} parent=27 // pred_check_branch
        %485 = sbr.rel (%p483) target = $region36
      $region35: #{global_embedding.3} parent=27 // pred_region
        _
      $region36: #{global_embedding.3} parent=27 // pred_fallthru
        _
      // Predicated region
      $region37: #{global_embedding.3} parent=27 // pred_check
        %p486 = pneg %p133
      $region38: #{global_embedding.3} parent=27 // pred_check_branch
        %488 = sbr.rel (%p486) target = $region40
      $region39: #{global_embedding.3} parent=27 // pred_region
        _
      $region40: #{global_embedding.3} parent=27 // pred_fallthru
        _
    $region28: #{global_embedding.3} parent=5 // pred_fallthru
      _
    %p489 = scmp.le.s32.totalorder 2, %s11
    // Predicated region
    $region41: #{global_embedding.3} parent=5 // pred_check
      %p490 = pneg %p489
    $region42: #{global_embedding.3} parent=5 // pred_check_branch
      %492 = sbr.rel (%p490) target = $region44
    $region43: #{global_embedding.3} parent=5 // pred_region
      %s493 = ssub.s32 %s11, 2
      // Predicated region
      $region45: #{global_embedding.3} parent=43 // pred_check
        %p494 = pneg %p87
      $region46: #{global_embedding.3} parent=43 // pred_check_branch
        %496 = sbr.rel (%p494) target = $region48
      $region47: #{global_embedding.3} parent=43 // pred_region
        %s497 = smul.u32 2, %s17
        %p498 = scmp.lt.s32.totalorder %s497, 7
        %s499 = scalar_select %p498, %s497, 7
        %s500 = smul.addr %s499, 2
        %s501 = smul.addr %s500, 8
        %s502 = scalar_lea.vmem %s2, %s501
      $region48: #{global_embedding.3} parent=43 // pred_fallthru
        _
      // Predicated region
      $region49: #{global_embedding.3} parent=43 // pred_check
        %p503 = pneg %p113
      $region50: #{global_embedding.3} parent=43 // pred_check_branch
        %505 = sbr.rel (%p503) target = $region52
      $region51: #{global_embedding.3} parent=43 // pred_region
        %p506 = scmp.lt.s32.totalorder %s17, 3
        %s507 = scalar_select %p506, %s17, 3
        %s508 = smul.addr %s507, 2
        %s509 = scalar_lea.vmem %s3, %s508
      $region52: #{global_embedding.3} parent=43 // pred_fallthru
        _
      // Predicated region
      $region53: #{global_embedding.3} parent=43 // pred_check
        %p510 = pneg %p139
      $region54: #{global_embedding.3} parent=43 // pred_check_branch
        %512 = sbr.rel (%p510) target = $region56
      $region55: #{global_embedding.3} parent=43 // pred_region
        %p513 = scmp.lt.s32.totalorder %s17, 3
        %s514 = scalar_select %p513, %s17, 3
        %s515 = smul.addr %s514, 2
        %s516 = scalar_lea.vmem %s4, %s515
      $region56: #{global_embedding.3} parent=43 // pred_fallthru
        _
    $region44: #{global_embedding.3} parent=5 // pred_fallthru
      _
  $region6: #{global_embedding.3} parent=0 // loop_footer
    %s15 = sadd.s32 1, %s11
  $region7: #{global_embedding.3} parent=0 // loop_footer_branch
    %10 = sbr.rel target = $region3
  $region8: #{global_embedding.3} parent=0 // loop_exit
    _

// kernel: global_embedding.4
$region0: #{global_embedding.4}
  #allocation0 [shape = 'u32[]', space=smem, size = 0x4, offset = 0x4, fixed_abs, tag = 'smem constant byte address 0x4 - core index']
  #allocation1 [shape = 'u32[72,128]{1,0:T(1,128)}', space=vmem, size = 0x9000, scoped, tag = 'internal scratch']
  %s0 = inlined_call_operand.vmem [shape: f32[64,256], index: 0, kind: input, shape index: {}]
  %s1 = inlined_call_operand.vmem [shape: f32[2,256], index: 1, kind: input, shape index: {}]
  %s2 = inlined_call_operand.vmem [shape: bf16[256,128], index: 2, kind: input, shape index: {}]
  %s3 = inlined_call_operand.vmem [shape: f32[64,128], index: 3, kind: output, shape index: {0}]
  %s4 = inlined_call_operand.vmem [shape: f32[4,1,128], index: 4, kind: output, shape index: {1}]
  %s5 = inlined_call_operand.vmem [shape: f32[4,1,128], index: 5, kind: output, shape index: {2}]
  %6 = xla_tuple %s3, %s4, %s5
  %s7 = sld [smem:[#allocation0]]
  $region61: #{global_embedding.4} parent=0
    _
  %s9 = ssub.s32 1, %s7
  %s10 = scalar_select 0, %s9, %s7
  loop: start=0, step=1, limit=6
  $region2: #{global_embedding.4} parent=0 // loop_pre_header
    _
  $region3: #{global_embedding.4} parent=0 // loop_header
    %s12 = sphi 0, %s16
    %p13 = scmp.ge.s32.totalorder %s12, 6
    %s22 = sphi 0, %s24
    %s25 = sphi 0, %s22
    %s26 = sphi 0, %s25
    %s42 = sphi 0, %s26
    %s46 = sphi 0, %s46
    %s48 = sphi 0, %s46
    %s49 = sphi 0, %s48
    %s63 = sphi 0, %s49
    %s67 = sphi 0, %s67
    %s69 = sphi 0, %s67
    %s70 = sphi 0, %s69
    %s84 = sphi 0, %s70
    %s90 = sphi 0, %s92
    %s93 = sphi 0, %s90
    %s94 = sphi 0, %s93
    %s110 = sphi 0, %s94
    %s116 = sphi 0, %s118
    %s119 = sphi 0, %s116
    %s120 = sphi 0, %s119
    %s136 = sphi 0, %s120
    %s142 = sphi 0, %s144
    %s145 = sphi 0, %s142
    %s146 = sphi 0, %s145
    %s162 = sphi 0, %s146
  $region4: #{global_embedding.4} parent=0 // loop_header_branch
    %15 = sbr.rel (%p13) target = $region8
  $region5: #{global_embedding.4} parent=0 // loop_body
    %s17 = ssub.s32 %s12, 1
    %s18 = ssub.s32 %s12, 2
    %s19 = sadd.s32 %s12, 1
    %s20 = ssub.s32 %s12, %s19
    %p21 = scmp.eq.s32.totalorder %s20, 0
    %s23 = sadd.s32 %s22, 1
    %s24 = scalar_select %p21, %s22, %s23
    %p27 = pneg %p21
    %p28 = scmp.eq.s32.totalorder %s12, 3
    %p29 = por %p27, %p28
    %p30 = scmp.ne.s32.totalorder %s22, %s25
    %p31 = scmp.eq.s32.totalorder %s12, 0
    %p32 = por %p30, %p31
    %p33 = scmp.ne.s32.totalorder %s22, %s25
    %p34 = scmp.eq.s32.totalorder %s17, 3
    %p35 = por %p33, %p34
    %p36 = scmp.ne.s32.totalorder %s25, %s26
    %p37 = scmp.eq.s32.totalorder %s17, 0
    %p38 = por %p36, %p37
    %p39 = scmp.ne.s32.totalorder %s25, %s26
    %p40 = scmp.eq.s32.totalorder %s18, 3
    %p41 = por %p39, %p40
    %p43 = scmp.ne.s32.totalorder %s26, %s42
    %p44 = scmp.eq.s32.totalorder %s18, 0
    %p45 = por %p43, %p44
    %s47 = sadd.s32 %s46, 1
    %p50 = scmp.eq.s32.totalorder %s12, 3
    %p51 = scmp.ne.s32.totalorder %s46, %s48
    %p52 = scmp.eq.s32.totalorder %s12, 0
    %p53 = por %p51, %p52
    %p54 = scmp.ne.s32.totalorder %s46, %s48
    %p55 = scmp.eq.s32.totalorder %s17, 3
    %p56 = por %p54, %p55
    %p57 = scmp.ne.s32.totalorder %s48, %s49
    %p58 = scmp.eq.s32.totalorder %s17, 0
    %p59 = por %p57, %p58
    %p60 = scmp.ne.s32.totalorder %s48, %s49
    %p61 = scmp.eq.s32.totalorder %s18, 3
    %p62 = por %p60, %p61
    %p64 = scmp.ne.s32.totalorder %s49, %s63
    %p65 = scmp.eq.s32.totalorder %s18, 0
    %p66 = por %p64, %p65
    %s68 = sadd.s32 %s67, 1
    %p71 = scmp.eq.s32.totalorder %s12, 3
    %p72 = scmp.ne.s32.totalorder %s67, %s69
    %p73 = scmp.eq.s32.totalorder %s12, 0
    %p74 = por %p72, %p73
    %p75 = scmp.ne.s32.totalorder %s67, %s69
    %p76 = scmp.eq.s32.totalorder %s17, 3
    %p77 = por %p75, %p76
    %p78 = scmp.ne.s32.totalorder %s69, %s70
    %p79 = scmp.eq.s32.totalorder %s17, 0
    %p80 = por %p78, %p79
    %p81 = scmp.ne.s32.totalorder %s69, %s70
    %p82 = scmp.eq.s32.totalorder %s18, 3
    %p83 = por %p81, %p82
    %p85 = scmp.ne.s32.totalorder %s70, %s84
    %p86 = scmp.eq.s32.totalorder %s18, 0
    %p87 = por %p85, %p86
    %s88 = ssub.s32 %s12, %s19
    %p89 = scmp.eq.s32.totalorder %s88, 0
    %s91 = sadd.s32 %s90, 1
    %s92 = scalar_select %p89, %s90, %s91
    %p95 = pneg %p89
    %p96 = scmp.eq.s32.totalorder %s12, 3
    %p97 = por %p95, %p96
    %p98 = scmp.ne.s32.totalorder %s90, %s93
    %p99 = scmp.eq.s32.totalorder %s12, 0
    %p100 = por %p98, %p99
    %p101 = scmp.ne.s32.totalorder %s90, %s93
    %p102 = scmp.eq.s32.totalorder %s17, 3
    %p103 = por %p101, %p102
    %p104 = scmp.ne.s32.totalorder %s93, %s94
    %p105 = scmp.eq.s32.totalorder %s17, 0
    %p106 = por %p104, %p105
    %p107 = scmp.ne.s32.totalorder %s93, %s94
    %p108 = scmp.eq.s32.totalorder %s18, 3
    %p109 = por %p107, %p108
    %p111 = scmp.ne.s32.totalorder %s94, %s110
    %p112 = scmp.eq.s32.totalorder %s18, 0
    %p113 = por %p111, %p112
    %s114 = ssub.s32 %s12, %s19
    %p115 = scmp.eq.s32.totalorder %s114, 0
    %s117 = sadd.s32 %s116, 1
    %s118 = scalar_select %p115, %s116, %s117
    %p121 = pneg %p115
    %p122 = scmp.eq.s32.totalorder %s12, 3
    %p123 = por %p121, %p122
    %p124 = scmp.ne.s32.totalorder %s116, %s119
    %p125 = scmp.eq.s32.totalorder %s12, 0
    %p126 = por %p124, %p125
    %p127 = scmp.ne.s32.totalorder %s116, %s119
    %p128 = scmp.eq.s32.totalorder %s17, 3
    %p129 = por %p127, %p128
    %p130 = scmp.ne.s32.totalorder %s119, %s120
    %p131 = scmp.eq.s32.totalorder %s17, 0
    %p132 = por %p130, %p131
    %p133 = scmp.ne.s32.totalorder %s119, %s120
    %p134 = scmp.eq.s32.totalorder %s18, 3
    %p135 = por %p133, %p134
    %p137 = scmp.ne.s32.totalorder %s120, %s136
    %p138 = scmp.eq.s32.totalorder %s18, 0
    %p139 = por %p137, %p138
    %s140 = ssub.s32 %s12, %s19
    %p141 = scmp.eq.s32.totalorder %s140, 0
    %s143 = sadd.s32 %s142, 1
    %s144 = scalar_select %p141, %s142, %s143
    %p147 = pneg %p141
    %p148 = scmp.eq.s32.totalorder %s12, 3
    %p149 = por %p147, %p148
    %p150 = scmp.ne.s32.totalorder %s142, %s145
    %p151 = scmp.eq.s32.totalorder %s12, 0
    %p152 = por %p150, %p151
    %p153 = scmp.ne.s32.totalorder %s142, %s145
    %p154 = scmp.eq.s32.totalorder %s17, 3
    %p155 = por %p153, %p154
    %p156 = scmp.ne.s32.totalorder %s145, %s146
    %p157 = scmp.eq.s32.totalorder %s17, 0
    %p158 = por %p156, %p157
    %p159 = scmp.ne.s32.totalorder %s145, %s146
    %p160 = scmp.eq.s32.totalorder %s18, 3
    %p161 = por %p159, %p160
    %p163 = scmp.ne.s32.totalorder %s146, %s162
    %p164 = scmp.eq.s32.totalorder %s18, 0
    %p165 = por %p163, %p164
    %p166 = scmp.le.s32.totalorder 1, %s12
    %p167 = scmp.lt.s32.totalorder %s12, 5
    %p168 = pnand %p166, %p167
    %p169 = pneg %p168
    // Predicated region
    $region9: #{global_embedding.4} parent=5 // pred_check
      _
    $region10: #{global_embedding.4} parent=5 // pred_check_branch
      %171 = sbr.rel (%p168) target = $region12
    $region11: #{global_embedding.4} parent=5 // pred_region
      %s172 = ssub.s32 %s12, 1
      // Predicated region
      $region13: #{global_embedding.4} parent=11 // pred_check
        %p173 = pneg %p59
      $region14: #{global_embedding.4} parent=11 // pred_check_branch
        %175 = sbr.rel (%p173) target = $region16
      $region15: #{global_embedding.4} parent=11 // pred_region
        _
      $region16: #{global_embedding.4} parent=11 // pred_fallthru
        _
      // Predicated region
      $region17: #{global_embedding.4} parent=11 // pred_check
        %p176 = pneg %p80
      $region18: #{global_embedding.4} parent=11 // pred_check_branch
        %178 = sbr.rel (%p176) target = $region20
      $region19: #{global_embedding.4} parent=11 // pred_region
        _
      $region20: #{global_embedding.4} parent=11 // pred_fallthru
        _
    $region12: #{global_embedding.4} parent=5 // pred_fallthru
      _
    %p179 = scmp.lt.s32.totalorder %s12, 4
    // Predicated region
    $region21: #{global_embedding.4} parent=5 // pred_check
      %p180 = pneg %p179
    $region22: #{global_embedding.4} parent=5 // pred_check_branch
      %182 = sbr.rel (%p180) target = $region24
    $region23: #{global_embedding.4} parent=5 // pred_region
      // Predicated region
      $region25: #{global_embedding.4} parent=23 // pred_check
        %p183 = pneg %p32
      $region26: #{global_embedding.4} parent=23 // pred_check_branch
        %185 = sbr.rel (%p183) target = $region28
      $region27: #{global_embedding.4} parent=23 // pred_region
        %s186 = smul.u32 2, %s12
        %p187 = scmp.lt.s32.totalorder %s186, 7
        %s188 = scalar_select %p187, %s186, 7
        %s189 = smul.addr %s188, 2
        %s190 = smul.addr %s189, 8
        %s191 = scalar_lea.vmem %s0, %s190
        %s192 = smul.u32 2, %s12
      $region28: #{global_embedding.4} parent=23 // pred_fallthru
        _
    $region24: #{global_embedding.4} parent=5 // pred_fallthru
      _
    %p193 = scmp.le.s32.totalorder 1, %s12
    %p194 = scmp.lt.s32.totalorder %s12, 5
    %p195 = pnand %p193, %p194
    %p196 = pneg %p195
    // Predicated region
    $region29: #{global_embedding.4} parent=5 // pred_check
      _
    $region30: #{global_embedding.4} parent=5 // pred_check_branch
      %198 = sbr.rel (%p195) target = $region32
    $region31: #{global_embedding.4} parent=5 // pred_region
      %s199 = ssub.s32 %s12, 1
      %s200 = smul.u32 2, %s17
      %p201 = scmp.lt.s32.totalorder %s200, 7
      %s202 = scalar_select %p201, %s200, 7
      %s203 = smul.addr %s202, 2
      %s204 = smul.addr %s203, 8
      %s205 = scalar_lea.vmem %s0, %s204
      %p206 = pneg %p38
      %p207 = pneg %p35
      %p208 = pneg %p59
      %p209 = pneg %p56
      %p210 = pneg %p80
      %p211 = pneg %p77
      %p212 = pneg %p106
      %p213 = pneg %p103
      %s214 = smul.u32 2, %s17
      %p215 = scmp.lt.s32.totalorder %s214, 7
      %s216 = scalar_select %p215, %s214, 7
      %s217 = smul.addr %s216, 8
      %s218 = scalar_lea.vmem %s3, %s217
      %p219 = pneg %p132
      %p220 = pneg %p129
      %p221 = scmp.lt.s32.totalorder %s17, 3
      %s222 = scalar_select %p221, %s17, 3
      %s223 = scalar_lea.vmem %s4, %s222
      %p224 = pneg %p158
      %p225 = pneg %p155
      %p226 = scmp.lt.s32.totalorder %s17, 3
      %s227 = scalar_select %p226, %s17, 3
      %s228 = scalar_lea.vmem %s5, %s227
      %s229 = smul.u32 2, %s17
      %p230 = scmp.lt.s32.totalorder %s229, 7
      %s231 = scalar_select %p230, %s229, 7
      %s232 = smul.addr %s231, 2
      %s233 = smul.addr %s232, 8
      %s234 = scalar_lea.vmem %s0, %s233
      %s235 = smul.u32 2, %s17
      %s236 = smul.u32 2, %s17
      %p237 = scmp.lt.s32.totalorder %s236, 7
      %s238 = scalar_select %p237, %s236, 7
      %s239 = smul.addr %s238, 8
      %s240 = scalar_lea.vmem %s3, %s239
      %s241 = smul.u32 2, %s17
      %p242 = scmp.lt.s32.totalorder %s17, 3
      %s243 = scalar_select %p242, %s17, 3
      %s244 = scalar_lea.vmem %s4, %s243
      %p245 = scmp.lt.s32.totalorder %s17, 3
      %s246 = scalar_select %p245, %s17, 3
      %s247 = scalar_lea.vmem %s5, %s246
      %v248 = vld [vmem:[%s234] sm:$0xff]
      %v249 = vld [vmem:[%s234 + $0x8] sm:$0xff]
      %v250 = vld [vmem:[%s234 + $0x10] sm:$0xff]
      %v251 = vld [vmem:[%s234 + $0x18] sm:$0xff]
      %v252 = vld [vmem:[%s1] ss:$2 sm:$0x3]
      %v254 = vperm.slane %v252, 0
      %v255 = vperm.slane %v252, 1
      %v258 = vmul.f32 %v248, %v254
      %v259 = vmul.f32 %v249, %v255
      %v260 = vmul.f32 %v250, %v254
      %v261 = vmul.f32 %v251, %v255
      %s262 = scalar_lea.vmem %s1, 1
      %v263 = vld [vmem:[%s262] ss:$2 sm:$0x3]
      %v265 = vperm.slane %v263, 0
      %v266 = vperm.slane %v263, 1
      %v269 = vadd.f32 %v258, %v265
      %v270 = vadd.f32 %v259, %v266
      %v271 = vadd.f32 %v260, %v265
      %v272 = vadd.f32 %v261, %v266
      %v273 = vmax.f32 %v269, 0.0
      %v274 = vmax.f32 %v270, 0.0
      %v275 = vmax.f32 %v271, 0.0
      %v276 = vmax.f32 %v272, 0.0
      %v277 = vpack.c.bf16 %v275, %v273
      %v278 = vpack.c.bf16 %v276, %v274
      %v279 = vld [vmem:[%s2] sm:$0xf]
      %v280 = vld [vmem:[%s2 + $0x4] sm:$0xf]
      %v281 = vld [vmem:[%s2 + $0x8] sm:$0xf]
      %v282 = vld [vmem:[%s2 + $0xc] sm:$0xf]
      %v283 = vld [vmem:[%s2 + $0x10] sm:$0xf]
      %v284 = vld [vmem:[%s2 + $0x14] sm:$0xf]
      %v285 = vld [vmem:[%s2 + $0x18] sm:$0xf]
      %v286 = vld [vmem:[%s2 + $0x1c] sm:$0xf]
      %v287 = vld [vmem:[%s2 + $0x20] sm:$0xf]
      %v288 = vld [vmem:[%s2 + $0x24] sm:$0xf]
      %v289 = vld [vmem:[%s2 + $0x28] sm:$0xf]
      %v290 = vld [vmem:[%s2 + $0x2c] sm:$0xf]
      %v291 = vld [vmem:[%s2 + $0x30] sm:$0xf]
      %v292 = vld [vmem:[%s2 + $0x34] sm:$0xf]
      %v293 = vld [vmem:[%s2 + $0x38] sm:$0xf]
      %v294 = vld [vmem:[%s2 + $0x3c] sm:$0xf]
      %v295 = vld [vmem:[%s2 + $0x40] sm:$0xf]
      %v296 = vld [vmem:[%s2 + $0x44] sm:$0xf]
      %v297 = vld [vmem:[%s2 + $0x48] sm:$0xf]
      %v298 = vld [vmem:[%s2 + $0x4c] sm:$0xf]
      %v299 = vld [vmem:[%s2 + $0x50] sm:$0xf]
      %v300 = vld [vmem:[%s2 + $0x54] sm:$0xf]
      %v301 = vld [vmem:[%s2 + $0x58] sm:$0xf]
      %v302 = vld [vmem:[%s2 + $0x5c] sm:$0xf]
      %v303 = vld [vmem:[%s2 + $0x60] sm:$0xf]
      %v304 = vld [vmem:[%s2 + $0x64] sm:$0xf]
      %v305 = vld [vmem:[%s2 + $0x68] sm:$0xf]
      %v306 = vld [vmem:[%s2 + $0x6c] sm:$0xf]
      %v307 = vld [vmem:[%s2 + $0x70] sm:$0xf]
      %v308 = vld [vmem:[%s2 + $0x74] sm:$0xf]
      %v309 = vld [vmem:[%s2 + $0x78] sm:$0xf]
      %v310 = vld [vmem:[%s2 + $0x7c] sm:$0xf]
      %v343 = vunpack.c.l.b16 %v279
      %v344 = vunpack.c.l.b16 %v280
      %v345 = vunpack.c.l.b16 %v281
      %v346 = vunpack.c.l.b16 %v282
      %v347 = vunpack.c.l.b16 %v283
      %v348 = vunpack.c.l.b16 %v284
      %v349 = vunpack.c.l.b16 %v285
      %v350 = vunpack.c.l.b16 %v286
      %v351 = vunpack.c.l.b16 %v287
      %v352 = vunpack.c.l.b16 %v288
      %v353 = vunpack.c.l.b16 %v289
      %v354 = vunpack.c.l.b16 %v290
      %v355 = vunpack.c.l.b16 %v291
      %v356 = vunpack.c.l.b16 %v292
      %v357 = vunpack.c.l.b16 %v293
      %v358 = vunpack.c.l.b16 %v294
      %v359 = vunpack.c.l.b16 %v295
      %v360 = vunpack.c.l.b16 %v296
      %v361 = vunpack.c.l.b16 %v297
      %v362 = vunpack.c.l.b16 %v298
      %v363 = vunpack.c.l.b16 %v299
      %v364 = vunpack.c.l.b16 %v300
      %v365 = vunpack.c.l.b16 %v301
      %v366 = vunpack.c.l.b16 %v302
      %v367 = vunpack.c.l.b16 %v303
      %v368 = vunpack.c.l.b16 %v304
      %v369 = vunpack.c.l.b16 %v305
      %v370 = vunpack.c.l.b16 %v306
      %v371 = vunpack.c.l.b16 %v307
      %v372 = vunpack.c.l.b16 %v308
      %v373 = vunpack.c.l.b16 %v309
      %v374 = vunpack.c.l.b16 %v310
      %v375 = vpack.c.b16 %v344, %v343
      %v376 = vpack.c.b16 %v346, %v345
      %v377 = vpack.c.b16 %v348, %v347
      %v378 = vpack.c.b16 %v350, %v349
      %v379 = vpack.c.b16 %v352, %v351
      %v380 = vpack.c.b16 %v354, %v353
      %v381 = vpack.c.b16 %v356, %v355
      %v382 = vpack.c.b16 %v358, %v357
      %v383 = vpack.c.b16 %v360, %v359
      %v384 = vpack.c.b16 %v362, %v361
      %v385 = vpack.c.b16 %v364, %v363
      %v386 = vpack.c.b16 %v366, %v365
      %v387 = vpack.c.b16 %v368, %v367
      %v388 = vpack.c.b16 %v370, %v369
      %v389 = vpack.c.b16 %v372, %v371
      %v390 = vpack.c.b16 %v374, %v373
      %407 = vmatpush.bf16.msra.mxu0 %v382
      %408 = vmatpush.bf16.msra.mxu0 %v381
      %409 = vmatpush.bf16.msra.mxu0 %v380
      %410 = vmatpush.bf16.msra.mxu0 %v379
      %411 = vmatpush.bf16.msra.mxu0 %v378
      %412 = vmatpush.bf16.msra.mxu0 %v377
      %413 = vmatpush.bf16.msra.mxu0 %v376
      %414 = vmatpush.bf16.msra.mxu0 %v375
      %415 = vmatmul.bf16.gmra.mxu0 %v277
      %v416 = vpop.f32.mrf.mxu0
      %v417 = vadd.f32 0.0, %v416
      %v418 = vpop.f32.mrf.mxu0
      %v419 = vadd.f32 0.0, %v418
      %420 = vdwg.mxu0
      %421 = vmatpush.bf16.msra.mxu0 %v390
      %422 = vmatpush.bf16.msra.mxu0 %v389
      %423 = vmatpush.bf16.msra.mxu0 %v388
      %424 = vmatpush.bf16.msra.mxu0 %v387
      %425 = vmatpush.bf16.msra.mxu0 %v386
      %426 = vmatpush.bf16.msra.mxu0 %v385
      %427 = vmatpush.bf16.msra.mxu0 %v384
      %428 = vmatpush.bf16.msra.mxu0 %v383
      %429 = vmatmul.bf16.gmra.mxu0 %v278
      %v430 = vpop.f32.mrf.mxu0
      %v431 = vadd.f32 %v417, %v430
      %v432 = vpop.f32.mrf.mxu0
      %v433 = vadd.f32 %v419, %v432
      %434 = vdwg.mxu0
      %435 = vst [vmem:[%s240] sm:$0xff] %v431
      %436 = vst [vmem:[%s240 + $0x8] sm:$0xff] %v433
      %vm437 = vcmask 130048
      %v439 = vsel %vm437, 1.0, 0
      %441 = vmatpush.msra.mxu0 0.0
      %442 = vmatpush.msra.mxu0 0.0
      %443 = vmatpush.msra.mxu0 0.0
      %444 = vmatpush.msra.mxu0 0.0
      %445 = vmatpush.msra.mxu0 0.0
      %446 = vmatpush.msra.mxu0 0.0
      %447 = vmatpush.msra.mxu0 0.0
      %448 = vmatpush.msra.mxu0 0.0
      %449 = vmatpush.msra.mxu0 0.0
      %450 = vmatpush.msra.mxu0 0.0
      %451 = vmatpush.msra.mxu0 0.0
      %452 = vmatpush.msra.mxu0 0.0
      %453 = vmatpush.msra.mxu0 0.0
      %454 = vmatpush.msra.mxu0 0.0
      %455 = vmatpush.msra.mxu0 %v433
      %456 = vmatpush.msra.mxu0 %v431
      %457 = vmatmul.f32.gmra.mxu0 %v439
      %v458 = vpop.f32.mrf.mxu0
      %v459 = vadd.f32 0.0, %v458
      %460 = vdwg.mxu0
      %461 = vst [vmem:[%s244] sm:$0x1] %v459
      %v462 = vmul.f32 %v431, %v431
      %v463 = vmul.f32 %v433, %v433
      %464 = vmatpush.msra.mxu0 0.0
      %465 = vmatpush.msra.mxu0 0.0
      %466 = vmatpush.msra.mxu0 0.0
      %467 = vmatpush.msra.mxu0 0.0
      %468 = vmatpush.msra.mxu0 0.0
      %469 = vmatpush.msra.mxu0 0.0
      %470 = vmatpush.msra.mxu0 0.0
      %471 = vmatpush.msra.mxu0 0.0
      %472 = vmatpush.msra.mxu0 0.0
      %473 = vmatpush.msra.mxu0 0.0
      %474 = vmatpush.msra.mxu0 0.0
      %475 = vmatpush.msra.mxu0 0.0
      %476 = vmatpush.msra.mxu0 0.0
      %477 = vmatpush.msra.mxu0 0.0
      %478 = vmatpush.msra.mxu0 %v463
      %479 = vmatpush.msra.mxu0 %v462
      %480 = vmatmul.f32.gmra.mxu0 %v439
      %v481 = vpop.f32.mrf.mxu0
      %v482 = vadd.f32 0.0, %v481
      %483 = vdwg.mxu0
      %484 = vst [vmem:[%s247] sm:$0x1] %v482
      %s485 = smul.u32 2, %s17
      %p486 = scmp.lt.s32.totalorder %s485, 7
      %s487 = scalar_select %p486, %s485, 7
      %s488 = smul.addr %s487, 8
      %s489 = scalar_lea.vmem %s3, %s488
      %p490 = scmp.lt.s32.totalorder %s17, 3
      %s491 = scalar_select %p490, %s17, 3
      %s492 = scalar_lea.vmem %s4, %s491
      %p493 = scmp.lt.s32.totalorder %s17, 3
      %s494 = scalar_select %p493, %s17, 3
      %s495 = scalar_lea.vmem %s5, %s494
      // Predicated region
      $region33: #{global_embedding.4} parent=31 // pred_check
        %p496 = pneg %p103
      $region34: #{global_embedding.4} parent=31 // pred_check_branch
        %498 = sbr.rel (%p496) target = $region36
      $region35: #{global_embedding.4} parent=31 // pred_region
        %s499 = smul.u32 2, %s17
      $region36: #{global_embedding.4} parent=31 // pred_fallthru
        _
      // Predicated region
      $region37: #{global_embedding.4} parent=31 // pred_check
        %p500 = pneg %p129
      $region38: #{global_embedding.4} parent=31 // pred_check_branch
        %502 = sbr.rel (%p500) target = $region40
      $region39: #{global_embedding.4} parent=31 // pred_region
        _
      $region40: #{global_embedding.4} parent=31 // pred_fallthru
        _
      // Predicated region
      $region41: #{global_embedding.4} parent=31 // pred_check
        %p503 = pneg %p155
      $region42: #{global_embedding.4} parent=31 // pred_check_branch
        %505 = sbr.rel (%p503) target = $region44
      $region43: #{global_embedding.4} parent=31 // pred_region
        _
      $region44: #{global_embedding.4} parent=31 // pred_fallthru
        _
    $region32: #{global_embedding.4} parent=5 // pred_fallthru
      _
    %p506 = scmp.le.s32.totalorder 2, %s12
    // Predicated region
    $region45: #{global_embedding.4} parent=5 // pred_check
      %p507 = pneg %p506
    $region46: #{global_embedding.4} parent=5 // pred_check_branch
      %509 = sbr.rel (%p507) target = $region48
    $region47: #{global_embedding.4} parent=5 // pred_region
      %s510 = ssub.s32 %s12, 2
      // Predicated region
      $region49: #{global_embedding.4} parent=47 // pred_check
        %p511 = pneg %p109
      $region50: #{global_embedding.4} parent=47 // pred_check_branch
        %513 = sbr.rel (%p511) target = $region52
      $region51: #{global_embedding.4} parent=47 // pred_region
        %s514 = smul.u32 2, %s18
        %p515 = scmp.lt.s32.totalorder %s514, 7
        %s516 = scalar_select %p515, %s514, 7
        %s517 = smul.addr %s516, 8
        %s518 = scalar_lea.vmem %s3, %s517
      $region52: #{global_embedding.4} parent=47 // pred_fallthru
        _
      // Predicated region
      $region53: #{global_embedding.4} parent=47 // pred_check
        %p519 = pneg %p135
      $region54: #{global_embedding.4} parent=47 // pred_check_branch
        %521 = sbr.rel (%p519) target = $region56
      $region55: #{global_embedding.4} parent=47 // pred_region
        %p522 = scmp.lt.s32.totalorder %s18, 3
        %s523 = scalar_select %p522, %s18, 3
        %s524 = scalar_lea.vmem %s4, %s523
      $region56: #{global_embedding.4} parent=47 // pred_fallthru
        _
      // Predicated region
      $region57: #{global_embedding.4} parent=47 // pred_check
        %p525 = pneg %p161
      $region58: #{global_embedding.4} parent=47 // pred_check_branch
        %527 = sbr.rel (%p525) target = $region60
      $region59: #{global_embedding.4} parent=47 // pred_region
        %p528 = scmp.lt.s32.totalorder %s18, 3
        %s529 = scalar_select %p528, %s18, 3
        %s530 = scalar_lea.vmem %s5, %s529
      $region60: #{global_embedding.4} parent=47 // pred_fallthru
        _
    $region48: #{global_embedding.4} parent=5 // pred_fallthru
      _
  $region6: #{global_embedding.4} parent=0 // loop_footer
    %s16 = sadd.s32 1, %s12
  $region7: #{global_embedding.4} parent=0 // loop_footer_branch
    %11 = sbr.rel target = $region3
  $region8: #{global_embedding.4} parent=0 // loop_exit
    _

// kernel: global_embedding.5
$region0: #{global_embedding.5}
  #allocation0 [shape = 'u32[]', space=smem, size = 0x4, offset = 0x4, fixed_abs, tag = 'smem constant byte address 0x4 - core index']
  #allocation1 [shape = 'u32[72,128]{1,0:T(1,128)}', space=vmem, size = 0x9000, scoped, tag = 'internal scratch']
  %s0 = inlined_call_operand.vmem [shape: f32[64,128], index: 0, kind: input, shape index: {}]
  %s1 = inlined_call_operand.vmem [shape: f32[2,128], index: 1, kind: input, shape index: {}]
  %s2 = inlined_call_operand.hbm [shape: f32[64,128], index: 2, kind: output, shape index: {}]
  %s3 = sld [smem:[#allocation0]]
  $region41: #{global_embedding.5} parent=0
    _
  %s5 = ssub.s32 1, %s3
  %s6 = scalar_select 0, %s5, %s3
  $region1: #{global_embedding.5} parent=0
    #allocation2 [shape = 'u8[16384]{0}', space=vmem, size = 0x4000, scoped, tag = 'output window, operand 0']
    #allocation3 [shape = 's32[2]{0}', space=sflag, size = 0x8, scoped, tag = 'scoped memory for global_embedding.5']
    %7 = vsyncpa [#allocation3], 0
    %s8 = scalar_lea.sflag [#allocation3], 1
    %9 = vsyncpa %s8, 0
    loop: start=0, step=1, limit=6
    $region2: #{global_embedding.5} parent=1 // loop_pre_header
      _
    $region3: #{global_embedding.5} parent=1 // loop_header
      %s11 = sphi 0, %s15
      %p12 = scmp.ge.s32.totalorder %s11, 6
      %s21 = sphi 0, %s23
      %s24 = sphi 0, %s21
      %s25 = sphi 0, %s24
      %s41 = sphi 0, %s25
      %s45 = sphi 0, %s45
      %s47 = sphi 0, %s45
      %s48 = sphi 0, %s47
      %s62 = sphi 0, %s48
      %s68 = sphi 0, %s70
      %s71 = sphi 0, %s68
      %s72 = sphi 0, %s71
      %s88 = sphi 0, %s72
    $region4: #{global_embedding.5} parent=1 // loop_header_branch
      %14 = sbr.rel (%p12) target = $region8
    $region5: #{global_embedding.5} parent=1 // loop_body
      %s16 = ssub.s32 %s11, 1
      %s17 = ssub.s32 %s11, 2
      %s18 = sadd.s32 %s11, 1
      %s19 = ssub.s32 %s11, %s18
      %p20 = scmp.eq.s32.totalorder %s19, 0
      %s22 = sadd.s32 %s21, 1
      %s23 = scalar_select %p20, %s21, %s22
      %p26 = pneg %p20
      %p27 = scmp.eq.s32.totalorder %s11, 3
      %p28 = por %p26, %p27
      %p29 = scmp.ne.s32.totalorder %s21, %s24
      %p30 = scmp.eq.s32.totalorder %s11, 0
      %p31 = por %p29, %p30
      %p32 = scmp.ne.s32.totalorder %s21, %s24
      %p33 = scmp.eq.s32.totalorder %s16, 3
      %p34 = por %p32, %p33
      %p35 = scmp.ne.s32.totalorder %s24, %s25
      %p36 = scmp.eq.s32.totalorder %s16, 0
      %p37 = por %p35, %p36
      %p38 = scmp.ne.s32.totalorder %s24, %s25
      %p39 = scmp.eq.s32.totalorder %s17, 3
      %p40 = por %p38, %p39
      %p42 = scmp.ne.s32.totalorder %s25, %s41
      %p43 = scmp.eq.s32.totalorder %s17, 0
      %p44 = por %p42, %p43
      %s46 = sadd.s32 %s45, 1
      %p49 = scmp.eq.s32.totalorder %s11, 3
      %p50 = scmp.ne.s32.totalorder %s45, %s47
      %p51 = scmp.eq.s32.totalorder %s11, 0
      %p52 = por %p50, %p51
      %p53 = scmp.ne.s32.totalorder %s45, %s47
      %p54 = scmp.eq.s32.totalorder %s16, 3
      %p55 = por %p53, %p54
      %p56 = scmp.ne.s32.totalorder %s47, %s48
      %p57 = scmp.eq.s32.totalorder %s16, 0
      %p58 = por %p56, %p57
      %p59 = scmp.ne.s32.totalorder %s47, %s48
      %p60 = scmp.eq.s32.totalorder %s17, 3
      %p61 = por %p59, %p60
      %p63 = scmp.ne.s32.totalorder %s48, %s62
      %p64 = scmp.eq.s32.totalorder %s17, 0
      %p65 = por %p63, %p64
      %s66 = ssub.s32 %s11, %s18
      %p67 = scmp.eq.s32.totalorder %s66, 0
      %s69 = sadd.s32 %s68, 1
      %s70 = scalar_select %p67, %s68, %s69
      %p73 = pneg %p67
      %p74 = scmp.eq.s32.totalorder %s11, 3
      %p75 = por %p73, %p74
      %p76 = scmp.ne.s32.totalorder %s68, %s71
      %p77 = scmp.eq.s32.totalorder %s11, 0
      %p78 = por %p76, %p77
      %p79 = scmp.ne.s32.totalorder %s68, %s71
      %p80 = scmp.eq.s32.totalorder %s16, 3
      %p81 = por %p79, %p80
      %p82 = scmp.ne.s32.totalorder %s71, %s72
      %p83 = scmp.eq.s32.totalorder %s16, 0
      %p84 = por %p82, %p83
      %p85 = scmp.ne.s32.totalorder %s71, %s72
      %p86 = scmp.eq.s32.totalorder %s17, 3
      %p87 = por %p85, %p86
      %p89 = scmp.ne.s32.totalorder %s72, %s88
      %p90 = scmp.eq.s32.totalorder %s17, 0
      %p91 = por %p89, %p90
      %p92 = scmp.le.s32.totalorder 1, %s11
      %p93 = scmp.lt.s32.totalorder %s11, 5
      %p94 = pnand %p92, %p93
      %p95 = pneg %p94
      // Predicated region
      $region9: #{global_embedding.5} parent=5 // pred_check
        _
      $region10: #{global_embedding.5} parent=5 // pred_check_branch
        %97 = sbr.rel (%p94) target = $region12
      $region11: #{global_embedding.5} parent=5 // pred_region
        %s98 = ssub.s32 %s11, 1
        // Predicated region
        $region13: #{global_embedding.5} parent=11 // pred_check
          %p99 = pneg %p58
        $region14: #{global_embedding.5} parent=11 // pred_check_branch
          %101 = sbr.rel (%p99) target = $region16
        $region15: #{global_embedding.5} parent=11 // pred_region
          _
        $region16: #{global_embedding.5} parent=11 // pred_fallthru
          _
      $region12: #{global_embedding.5} parent=5 // pred_fallthru
        _
      %p102 = scmp.lt.s32.totalorder %s11, 4
      // Predicated region
      $region17: #{global_embedding.5} parent=5 // pred_check
        %p103 = pneg %p102
      $region18: #{global_embedding.5} parent=5 // pred_check_branch
        %105 = sbr.rel (%p103) target = $region20
      $region19: #{global_embedding.5} parent=5 // pred_region
        // Predicated region
        $region21: #{global_embedding.5} parent=19 // pred_check
          %p106 = pneg %p31
        $region22: #{global_embedding.5} parent=19 // pred_check_branch
          %108 = sbr.rel (%p106) target = $region24
        $region23: #{global_embedding.5} parent=19 // pred_region
          %s109 = smul.u32 2, %s11
          %p110 = scmp.lt.s32.totalorder %s109, 7
          %s111 = scalar_select %p110, %s109, 7
          %s112 = smul.addr %s111, 8
          %s113 = scalar_lea.vmem %s0, %s112
          %s114 = smul.u32 2, %s11
        $region24: #{global_embedding.5} parent=19 // pred_fallthru
          _
      $region20: #{global_embedding.5} parent=5 // pred_fallthru
        _
      %p115 = scmp.le.s32.totalorder 1, %s11
      %p116 = scmp.lt.s32.totalorder %s11, 5
      %p117 = pnand %p115, %p116
      %p118 = pneg %p117
      // Predicated region
      $region25: #{global_embedding.5} parent=5 // pred_check
        _
      $region26: #{global_embedding.5} parent=5 // pred_check_branch
        %120 = sbr.rel (%p117) target = $region28
      $region27: #{global_embedding.5} parent=5 // pred_region
        %s121 = ssub.s32 %s11, 1
        %s122 = smul.u32 2, %s16
        %p123 = scmp.lt.s32.totalorder %s122, 7
        %s124 = scalar_select %p123, %s122, 7
        %s125 = smul.addr %s124, 8
        %s126 = scalar_lea.vmem %s0, %s125
        %p127 = pneg %p37
        %p128 = pneg %p34
        %p129 = pneg %p58
        %p130 = pneg %p55
        %p131 = pneg %p84
        %p132 = pneg %p81
        %s133 = sand.u32 %s71, 1
        %s134 = scalar_lea.sflag [#allocation3], %s133
        %s135 = sand.u32 %s71, 1
        %s136 = smul.addr %s135, 16
        %s137 = scalar_lea.vmem [#allocation2], %s136
        %s138 = smul.u32 2, %s16
        %p139 = scmp.lt.s32.totalorder %s138, 7
        %s140 = scalar_select %p139, %s138, 7
        %s141 = smul.addr %s140, 8
        %s142 = scalar_lea.vmem %s0, %s141
        %s143 = smul.u32 2, %s16
        %s144 = smul.u32 2, %s16
        %v145 = vld [vmem:[%s142] sm:$0xff]
        %v146 = vld [vmem:[%s142 + $0x8] sm:$0xff]
        %v147 = vld [vmem:[%s1] sm:$0x1]
        %v148 = vperm.slane %v147, 0
        %v149 = vmul.f32 %v145, %v148
        %v150 = vmul.f32 %v146, %v148
        %v151 = vld [vmem:[%s1 + $0x1] sm:$0x1]
        %v152 = vperm.slane %v151, 0
        %v153 = vadd.f32 %v149, %v152
        %v154 = vadd.f32 %v150, %v152
        %155 = vst [vmem:[%s137] sm:$0xff] %v153
        %156 = vst [vmem:[%s137 + $0x8] sm:$0xff] %v154
        %s157 = sand.u32 %s71, 1
        %s158 = scalar_lea.sflag [#allocation3], %s157
        %s159 = sand.u32 %s71, 1
        %s160 = smul.addr %s159, 16
        %s161 = scalar_lea.vmem [#allocation2], %s160
        // Predicated region
        $region29: #{global_embedding.5} parent=27 // pred_check
          %p162 = pneg %p81
        $region30: #{global_embedding.5} parent=27 // pred_check_branch
          %164 = sbr.rel (%p162) target = $region32
        $region31: #{global_embedding.5} parent=27 // pred_region
          %s165 = smul.u32 2, %s16
          %167 = vsyncadd %s158, 0
          %s168 = smul.addr %s165, 8
          %s169 = scalar_lea.hbm %s2, %s168
          %s170 = sshll.u32 %s161, 4
          %s171 = int_to_ptr.vmem [resolvable:$true] %s170
          %s172 = sshll.u32 %s169, 4
          %s173 = int_to_ptr.hbm [resolvable:$true] %s172
          %178 = dma.vmem_to_hbm [thread:$0]  %s171, 256, %s173, %s158, 128, 128, 8
        $region32: #{global_embedding.5} parent=27 // pred_fallthru
          _
      $region28: #{global_embedding.5} parent=5 // pred_fallthru
        _
      %p179 = scmp.le.s32.totalorder 2, %s11
      // Predicated region
      $region33: #{global_embedding.5} parent=5 // pred_check
        %p180 = pneg %p179
      $region34: #{global_embedding.5} parent=5 // pred_check_branch
        %182 = sbr.rel (%p180) target = $region36
      $region35: #{global_embedding.5} parent=5 // pred_region
        %s183 = ssub.s32 %s11, 2
        // Predicated region
        $region37: #{global_embedding.5} parent=35 // pred_check
          %p184 = pneg %p87
        $region38: #{global_embedding.5} parent=35 // pred_check_branch
          %186 = sbr.rel (%p184) target = $region40
        $region39: #{global_embedding.5} parent=35 // pred_region
          %s187 = sand.u32 %s72, 1
          %s188 = scalar_lea.sflag [#allocation3], %s187
          %s189 = sand.u32 %s72, 1
          %s190 = smul.addr %s189, 16
          %s191 = scalar_lea.vmem [#allocation2], %s190
          %193 = dma.done %s188, 256
        $region40: #{global_embedding.5} parent=35 // pred_fallthru
          _
      $region36: #{global_embedding.5} parent=5 // pred_fallthru
        _
    $region6: #{global_embedding.5} parent=1 // loop_footer
      %s15 = sadd.s32 1, %s11
    $region7: #{global_embedding.5} parent=1 // loop_footer_branch
      %10 = sbr.rel target = $region3
    $region8: #{global_embedding.5} parent=1 // loop_exit
      _
    %194 = vsyncpa [#allocation3], 1
    %s195 = scalar_lea.sflag [#allocation3], 1
    %196 = vsyncpa %s195, 1

</llo_original>
